<compile_context>
chip_gen: v7x
topology: tpu7x:2x2x1
jax: 0.10.0
libtpu: 0.0.40
codegen_flags: <defaults>
</compile_context>

<pallas_src>
import math
import functools

import numpy as np
import jax
import jax.numpy as jnp
from jax.experimental import pallas as pl
from jax.experimental.pallas import tpu as pltpu


def make_positional_encoding_table(max_len: int, d_model: int,
                                   dtype=jnp.float32) -> jnp.ndarray:
    """Deterministic pe buffer, identical math to the torch __init__."""
    position = jnp.arange(max_len, dtype=jnp.float32)[:, None]            # (L, 1)
    div_term = jnp.exp(jnp.arange(0, d_model, 2, dtype=jnp.float32)
                       * (-math.log(10000.0) / d_model))                  # (ceil(D/2),)
    pe = jnp.zeros((max_len, d_model), dtype=jnp.float32)
    pe = pe.at[:, 0::2].set(jnp.sin(position * div_term))
    if d_model % 2 == 1:
        pe = pe.at[:, 1::2].set(jnp.cos(position * div_term[: d_model // 2]))
    else:
        pe = pe.at[:, 1::2].set(jnp.cos(position * div_term))
    # torch: pe.unsqueeze(0).transpose(0, 1)  -> (max_len, 1, d_model)
    return pe[:, None, :].astype(dtype)


def _dropout_threshold(p: float) -> np.uint32:
    return np.uint32(min(int(round(p * (2 ** 32))), 2 ** 32 - 1))


def _posenc_eval_kernel(x_ref, pe_ref, o_ref, *, batch: int):
    """x_ref/o_ref: (TS, B*D) tile; pe_ref: (TS, D) tile."""
    pe_row = jnp.tile(pe_ref[...].astype(jnp.float32), (1, batch))        # (TS, B*D)
    o_ref[...] = (x_ref[...].astype(jnp.float32) + pe_row).astype(o_ref.dtype)


def _posenc_train_hwrng_kernel(seed_ref, x_ref, pe_ref, o_ref, *,
                               batch: int, p: float):
    """Training path using the on-chip hardware PRNG (no bits stream from HBM)."""
    pltpu.prng_seed(seed_ref[0], pl.program_id(0))                         # per-tile stream
    pe_row = jnp.tile(pe_ref[...].astype(jnp.float32), (1, batch))
    y = x_ref[...].astype(jnp.float32) + pe_row
    bits = pltpu.bitcast(pltpu.prng_random_bits(y.shape), jnp.uint32)
    keep = bits >= _dropout_threshold(p)
    o_ref[...] = jnp.where(keep, y * jnp.float32(1.0 / (1.0 - p)),
                           jnp.float32(0.0)).astype(o_ref.dtype)


def _posenc_train_bits_kernel(x_ref, pe_ref, bits_ref, o_ref, *,
                              batch: int, p: float):
    """Training fallback: random bits precomputed in the wrapper (non-TPU backends)."""
    pe_row = jnp.tile(pe_ref[...].astype(jnp.float32), (1, batch))
    y = x_ref[...].astype(jnp.float32) + pe_row
    keep = bits_ref[...] >= _dropout_threshold(p)
    o_ref[...] = jnp.where(keep, y * jnp.float32(1.0 / (1.0 - p)),
                           jnp.float32(0.0)).astype(o_ref.dtype)


def positional_encoding(x: jnp.ndarray, pe: jnp.ndarray, *,
                        p: float = 0.1, training: bool = False,
                        rng_key=None, block_rows: int | None = None,
                        use_hw_rng: bool | None = None) -> jnp.ndarray:
    """x: (S, B, D);  pe: (max_len, 1, D) with max_len >= S."""
    S, B, D = x.shape
    assert pe.shape[0] >= S and pe.shape[1] == 1 and pe.shape[2] == D

    pe_s = pe[:S, 0, :]                              # (S, D)
    x2 = x.reshape(S, B * D)                         # contiguous merge -> free reshape

    # ~2 MiB x-tiles: amortizes per-step Pallas overhead and sits near the HBM
    # roofline while x/out (+ optional bits) double-buffers fit the default
    # scoped-VMEM limit on v5e/v6e/v7x.
    itemsize = jnp.dtype(x.dtype).itemsize
    if block_rows is None:
        row_bytes = B * D * itemsize
        target_bytes = 2 * 1024 * 1024
        block_rows = max(1, min(S, target_bytes // max(row_bytes, 1)))
    if block_rows < S:
        block_rows = min(S, max(8, (block_rows // 8) * 8))   # sublane-aligned tiles
    grid = (pl.cdiv(S, block_rows),)

    use_dropout = training and p > 0.0

    if not use_dropout:
        # Eval mode: dropout is identity (matches module.eval()).
        x_spec = pl.BlockSpec((block_rows, B * D), lambda i: (i, 0))
        pe_spec = pl.BlockSpec((block_rows, D), lambda i: (i, 0))
        out2 = pl.pallas_call(
            functools.partial(_posenc_eval_kernel, batch=B),
            out_shape=jax.ShapeDtypeStruct((S, B * D), x.dtype),
            grid=grid,
            in_specs=[x_spec, pe_spec],
            out_specs=x_spec,
            compiler_params=pltpu.CompilerParams(
                dimension_semantics=("parallel",)),
        )(x2, pe_s)
        return out2.reshape(S, B, D)

    if rng_key is None:
        rng_key = jax.random.PRNGKey(0)
    if use_hw_rng is None:
        use_hw_rng = jax.default_backend() == "tpu"

    if use_hw_rng:
        # Scalar-prefetched seed (SMEM) + in-kernel hardware PRNG.
        seed = jax.random.randint(rng_key, (1,), 0, jnp.iinfo(jnp.int32).max,
                                  dtype=jnp.int32)
        x_spec = pl.BlockSpec((block_rows, B * D), lambda i, seed_ref: (i, 0))
        pe_spec = pl.BlockSpec((block_rows, D), lambda i, seed_ref: (i, 0))
        out2 = pl.pallas_call(
            functools.partial(_posenc_train_hwrng_kernel, batch=B, p=float(p)),
            out_shape=jax.ShapeDtypeStruct((S, B * D), x.dtype),
            grid_spec=pltpu.PrefetchScalarGridSpec(
                num_scalar_prefetch=1,
                grid=grid,
                in_specs=[x_spec, pe_spec],
                out_specs=x_spec),
            compiler_params=pltpu.CompilerParams(
                dimension_semantics=("parallel",)),
        )(seed, x2, pe_s)
    else:
        # TODO(synk): non-TPU fallback keeps an extra uint32 HBM stream.
        bits = jax.random.bits(rng_key, (S, B * D), dtype=jnp.uint32)
        x_spec = pl.BlockSpec((block_rows, B * D), lambda i: (i, 0))
        pe_spec = pl.BlockSpec((block_rows, D), lambda i: (i, 0))
        out2 = pl.pallas_call(
            functools.partial(_posenc_train_bits_kernel, batch=B, p=float(p)),
            out_shape=jax.ShapeDtypeStruct((S, B * D), x.dtype),
            grid=grid,
            in_specs=[x_spec, pe_spec, x_spec],
            out_specs=x_spec,
            compiler_params=pltpu.CompilerParams(
                dimension_semantics=("parallel",)),
        )(x2, pe_s, bits)

    return out2.reshape(S, B, D)


if __name__ == "__main__":
    S, B, D = 8, 2, 32
    MAX_LEN = 64
    P_DROP = 0.1

    key = jax.random.PRNGKey(0)
    x = jax.random.normal(key, (S, B, D), dtype=jnp.float32)
    pe = make_positional_encoding_table(MAX_LEN, D)
    ref = np.asarray(x + pe[:S])                 # broadcast (S,1,D) over batch

    # --- eval mode (dropout is identity, matches module.eval()) ---
    y_eval = jax.block_until_ready(
        positional_encoding(x, pe, p=P_DROP, training=False))
    np.testing.assert_allclose(np.asarray(y_eval), ref, rtol=1e-6, atol=1e-6)

    # --- train mode (inverted dropout inside the kernel) ---
    y_train = jax.block_until_ready(
        positional_encoding(x, pe, p=P_DROP, training=True,
                            rng_key=jax.random.PRNGKey(123)))
    y_np = np.asarray(y_train)
    kept = y_np != 0.0
    # kept elements must equal (x + pe) / (1 - p); dropped elements are exactly 0
    np.testing.assert_allclose(y_np[kept], ref[kept] / (1.0 - P_DROP),
                               rtol=1e-5, atol=1e-5)
    # dropout rate should be in a plausible range for p=0.1
    drop_frac = 1.0 - kept.mean()
    assert 0.0 <= drop_frac <= 0.35, f"implausible drop fraction {drop_frac}"

    print("KERNEL_OK")
</pallas_src>

<mosaic_0001>
module attributes {stable_mosaic.version = 11 : i64} {
  func.func @_posenc_eval_kernel(%arg0: i32, %arg1: memref<8x64xf32, #tpu.memory_space<vmem>>, %arg2: memref<8x32xf32, #tpu.memory_space<vmem>>, %arg3: memref<8x64xf32, #tpu.memory_space<vmem>>) attributes {dimension_semantics = [#tpu.dimension_semantics<parallel>], iteration_bounds = array<i64: 1>, scalar_prefetch = 0 : i64, scratch_operands = 0 : i64, tpu.core_type = #tpu.core_type<tc>, window_params = [{transform_indices = @transform_0, window_bounds = array<i64: 8, 64>}, {transform_indices = @transform_1, window_bounds = array<i64: 8, 32>}, {transform_indices = @transform_2, window_bounds = array<i64: 8, 64>}]} {
    %c0 = arith.constant 0 : index
    %c0_0 = arith.constant 0 : index
    %0 = vector.load %arg2[%c0, %c0_0] : memref<8x32xf32, #tpu.memory_space<vmem>>, vector<8x32xf32>
    %1 = tpu.concatenate %0, %0 in 1 : vector<8x32xf32>, vector<8x32xf32> -> vector<8x64xf32>
    %c0_1 = arith.constant 0 : index
    %c0_2 = arith.constant 0 : index
    %2 = vector.load %arg1[%c0_1, %c0_2] : memref<8x64xf32, #tpu.memory_space<vmem>>, vector<8x64xf32>
    %3 = arith.addf %2, %1 : vector<8x64xf32>
    %c0_3 = arith.constant 0 : index
    %c0_4 = arith.constant 0 : index
    %4 = vector.load %arg3[%c0_3, %c0_4] : memref<8x64xf32, #tpu.memory_space<vmem>>, vector<8x64xf32>
    tpu.vector_store %arg3[%c0_3, %c0_4], %3 {strides = array<i32>} : memref<8x64xf32, #tpu.memory_space<vmem>>, vector<8x64xf32>,
    return
  }
  func.func @transform_0(%arg0: i32) -> (i32, i32) {
    %c0_i32 = arith.constant 0 : i32
    %c0_i32_0 = arith.constant 0 : i32
    return %arg0, %c0_i32 : i32, i32
  }
  func.func @transform_1(%arg0: i32) -> (i32, i32) {
    %c0_i32 = arith.constant 0 : i32
    %c0_i32_0 = arith.constant 0 : i32
    return %arg0, %c0_i32 : i32, i32
  }
  func.func @transform_2(%arg0: i32) -> (i32, i32) {
    %c0_i32 = arith.constant 0 : i32
    %c0_i32_0 = arith.constant 0 : i32
    return %arg0, %c0_i32 : i32, i32
  }
}

</mosaic_0001>

<llo_original>
// kernel: tpu_custom_call.1
$region0: #{tpu_custom_call.1}
  #allocation0 [shape = 'u32[]', space=smem, size = 0x4, offset = 0x4, fixed_abs, tag = 'smem constant byte address 0x4 - core index']
  #allocation1 [shape = 'u32[144,128]{1,0:T(1,128)}', space=vmem, size = 0x12000, scoped, tag = 'internal scratch']
  %s0 = inlined_call_operand.hbm [shape: f32[8,64], index: 0, kind: input, shape index: {}]
  %s1 = inlined_call_operand.hbm [shape: f32[8,32], index: 1, kind: input, shape index: {}]
  %s2 = inlined_call_operand.hbm [shape: f32[8,64], index: 2, kind: output, shape index: {}]
  %s3 = sld [smem:[#allocation0]]
  $region26: #{tpu_custom_call.1} parent=0
    _
  %s5 = ssub.s32 1, %s3
  %s6 = scalar_select 0, %s5, %s3
  $region1: #{tpu_custom_call.1} parent=0
    #allocation2 [shape = 'u8[4096]{0}', space=vmem, size = 0x1000, scoped, tag = 'input window, operand 0, single buffered']
    #allocation3 [shape = 's32[1]{0}', space=sflag, size = 0x4, scoped, tag = 'scoped memory for tpu_custom_call.1']
    #allocation4 [shape = 's32[1]{0}', space=sflag, size = 0x4, scoped, tag = 'scoped memory for tpu_custom_call.1']
    #allocation5 [shape = 'u8[4096]{0}', space=vmem, size = 0x1000, scoped, tag = 'input window, operand 1, single buffered']
    #allocation6 [shape = 's32[1]{0}', space=sflag, size = 0x4, scoped, tag = 'scoped memory for tpu_custom_call.1']
    #allocation7 [shape = 'u8[4096]{0}', space=vmem, size = 0x1000, scoped, tag = 'output window, operand 0, single buffered']
    %7 = vsyncpa [#allocation3], 0
    %8 = vsyncpa [#allocation6], 0
    %9 = vsyncpa [#allocation4], 0
    // Predicated region
    $region2: #{tpu_custom_call.1} parent=1 // pred_check
      _
    $region3: #{tpu_custom_call.1} parent=1 // pred_check_branch
      %11 = sbr.rel (0) target = $region5
    $region4: #{tpu_custom_call.1} parent=1 // pred_region
      %s13 = ssub.s32 128, 128
      %14 = vsyncadd [#allocation3], %s13
      %s16 = sshll.u32 [#allocation2], 4
      %s17 = int_to_ptr.vmem [resolvable:$true] %s16
      %19 = dma.hbm_to_vmem [thread:$0]  %s0, 128, %s17, [#allocation3]
    $region5: #{tpu_custom_call.1} parent=1 // pred_fallthru
      _
    // Predicated region
    $region6: #{tpu_custom_call.1} parent=1 // pred_check
      _
    $region7: #{tpu_custom_call.1} parent=1 // pred_check_branch
      %21 = sbr.rel (0) target = $region9
    $region8: #{tpu_custom_call.1} parent=1 // pred_region
      %s23 = ssub.s32 128, 128
      %24 = vsyncadd [#allocation6], %s23
      %s26 = sshll.u32 [#allocation5], 4
      %s27 = int_to_ptr.vmem [resolvable:$true] %s26
      %29 = dma.hbm_to_vmem [thread:$0]  %s1, 128, %s27, [#allocation6]
    $region9: #{tpu_custom_call.1} parent=1 // pred_fallthru
      _
    // Predicated region
    $region10: #{tpu_custom_call.1} parent=1 // pred_check
      _
    $region11: #{tpu_custom_call.1} parent=1 // pred_check_branch
      %31 = sbr.rel (0) target = $region13
    $region12: #{tpu_custom_call.1} parent=1 // pred_region
      %32 = dma.done [#allocation3], 128
    $region13: #{tpu_custom_call.1} parent=1 // pred_fallthru
      _
    // Predicated region
    $region14: #{tpu_custom_call.1} parent=1 // pred_check
      _
    $region15: #{tpu_custom_call.1} parent=1 // pred_check_branch
      %34 = sbr.rel (0) target = $region17
    $region16: #{tpu_custom_call.1} parent=1 // pred_region
      %35 = dma.done [#allocation6], 128
    $region17: #{tpu_custom_call.1} parent=1 // pred_fallthru
      _
    %v36 = vld [vmem:[#allocation5] sm:$0xff]
    %38 = vrot.lane.b32.xlu0 %v36, 32
    %v39 = vpop.permute.xlu0 %38
    %vm41 = vcmask 261120
    %v42 = vsel %vm41, %v36, %v39
    %v43 = vld [vmem:[#allocation2] sm:$0xff]
    %v44 = vadd.f32 %v43, %v42
    %vm45 = vcmask 523264
    %46 = vst.msk [vmem:[#allocation7] sm:$0xff] %vm45, %v44
    // Predicated region
    $region18: #{tpu_custom_call.1} parent=1 // pred_check
      _
    $region19: #{tpu_custom_call.1} parent=1 // pred_check_branch
      %48 = sbr.rel (0) target = $region21
    $region20: #{tpu_custom_call.1} parent=1 // pred_region
      %s50 = ssub.s32 128, 128
      %51 = vsyncadd [#allocation4], %s50
      %s53 = sshll.u32 [#allocation7], 4
      %s54 = int_to_ptr.vmem [resolvable:$true] %s53
      %56 = dma.vmem_to_hbm [thread:$0]  %s54, 128, %s2, [#allocation4]
    $region21: #{tpu_custom_call.1} parent=1 // pred_fallthru
      _
    // Predicated region
    $region22: #{tpu_custom_call.1} parent=1 // pred_check
      _
    $region23: #{tpu_custom_call.1} parent=1 // pred_check_branch
      %58 = sbr.rel (0) target = $region25
    $region24: #{tpu_custom_call.1} parent=1 // pred_region
      %59 = dma.done [#allocation4], 128
    $region25: #{tpu_custom_call.1} parent=1 // pred_fallthru
      _
    %60 = vsyncpa [#allocation3], 1
    %61 = vsyncpa [#allocation6], 1
    %62 = vsyncpa [#allocation4], 1

</llo_original>
